<compile_context>
chip_gen: v7x
topology: tpu7x:2x2x1
jax: 0.10.0
libtpu: 0.0.40
codegen_flags: <defaults>
</compile_context>

<pallas_src>
import functools

import jax
import jax.numpy as jnp
import numpy as np
from jax import lax
from jax.experimental import pallas as pl
from jax.experimental.pallas import tpu as pltpu

LANE = 128


def _round_up(x, m):
    return ((x + m - 1) // m) * m


def _pick_batch_tile(n):
    """Batch tile: multiple of 8, capped at 64 rows, >=2 grid steps when the
    batch allows it (uses both v7x TensorCores via the "parallel" grid axis).
    Tiny / ragged batches fall back to a single full block (no tail masking
    needed)."""
    if n % 8 != 0:
        return n
    for nb in (64, 32, 16, 8):
        if n % nb == 0 and n // nb >= 2:
            return nb
    return n


def _replica_kernel(x_ref, w1_ref, b1_ref, w2_ref, b2_ref, o_ref):
    """Fused replica forward on one batch tile.

    x_ref : (Nb, H*W, 9*C) bf16  im2col patches (unpadded contraction dim)
    w1_ref: (9*C, Fp)      bf16  conv weights reshaped to a single matmul
    b1_ref: (1, Fp)        f32   conv bias (lane-padded)
    w2_ref: (Fp, Kp)       f32   fc weights, pre-scaled by 1/(H*W)
    b2_ref: (1, Kp)        f32   fc bias (lane-padded)
    o_ref : (Nb, Kp)       f32   lane-dense logits
    """
    nb, hw, c9 = x_ref.shape
    fp = w1_ref.shape[-1]

    x = x_ref[...].reshape(nb * hw, c9)
    # conv3x3 + bias + ReLU as one bf16 im2col matmul, f32 MXU accumulation.
    h = jnp.dot(x, w1_ref[...], preferred_element_type=jnp.float32)
    h = jnp.maximum(h + b1_ref[...], 0.0)
    # global average pool: 1/(H*W) folded into w2 -> plain sublane sum (XLU).
    feat = jnp.sum(h.reshape(nb, hw, fp), axis=1)            # (Nb, Fp) f32
    # tiny FC kept in f32 (negligible cost, preserves accuracy).
    logits = jnp.dot(feat, w2_ref[...],
                     preferred_element_type=jnp.float32) + b2_ref[...]
    o_ref[...] = logits.astype(o_ref.dtype)


@functools.partial(jax.jit, static_argnames=("n_dev",))
def data_parallel_forward(x_nchw, params, n_dev=2):
    """DataParallel-style forward (jitted end-to-end).

    The scatter over `n_dev` weight-shared replicas and the gather along
    dim=0 are the identity here, so the device axis is collapsed and the
    grid tiles the batch.  Uneven batches are handled naturally (no
    divisibility requirement on `n_dev`).
    """
    del n_dev  # scatter/gather is the identity for shared-weight replicas
    wc, bc, wf, bf = params
    N, C, H, W = x_nchw.shape
    F = wc.shape[-1]
    K = wf.shape[-1]
    C9 = 9 * C
    HW = H * W
    Fp = _round_up(F, LANE)
    Kp = _round_up(K, LANE)

    # --- layout prep (fused by jit into the same program) ------------------
    # NCHW -> NHWC, SAME pad, im2col -> (N, H*W, 9*C) bf16 (unpadded lanes).
    x = jnp.transpose(x_nchw, (0, 2, 3, 1)).astype(jnp.bfloat16)
    xp = jnp.pad(x, ((0, 0), (1, 1), (1, 1), (0, 0)))
    taps = [xp[:, dh:dh + H, dw:dw + W, :]
            for dh in range(3) for dw in range(3)]
    patches = jnp.concatenate(taps, axis=-1).reshape(N, HW, C9)
    # TODO(synk): for large H*W*C move the im2col into the kernel (DMA the
    # SAME-padded NHWC tile and build the 9 taps with shifted slices) so the
    # 9x-inflated patch tensor never round-trips HBM.

    # Conv as a single (9C, Fp) bf16 matmul; GAP mean folded into the f32 FC.
    w1 = jnp.pad(wc.reshape(C9, F), ((0, 0), (0, Fp - F))).astype(jnp.bfloat16)
    b1 = jnp.pad(bc.reshape(1, F), ((0, 0), (0, Fp - F))).astype(jnp.float32)
    w2 = jnp.pad(wf / float(HW), ((0, Fp - F), (0, Kp - K))).astype(jnp.float32)
    b2 = jnp.pad(bf.reshape(1, K), ((0, 0), (0, Kp - K))).astype(jnp.float32)

    Nb = _pick_batch_tile(N)
    grid = (N // Nb,)

    out = pl.pallas_call(
        _replica_kernel,
        out_shape=jax.ShapeDtypeStruct((N, Kp), jnp.float32),
        grid=grid,
        in_specs=[
            pl.BlockSpec((Nb, HW, C9), lambda i: (i, 0, 0)),
            # constant operands: whole-array VMEM residents, no per-step DMA
            # or pointless double-buffering.
            pl.BlockSpec(memory_space=pltpu.MemorySpace.VMEM),
            pl.BlockSpec(memory_space=pltpu.MemorySpace.VMEM),
            pl.BlockSpec(memory_space=pltpu.MemorySpace.VMEM),
            pl.BlockSpec(memory_space=pltpu.MemorySpace.VMEM),
        ],
        out_specs=pl.BlockSpec((Nb, Kp), lambda i: (i, 0)),
        compiler_params=pltpu.CompilerParams(
            dimension_semantics=("parallel",)),
    )(patches, w1, b1, w2, b2)

    # Gather = identity; drop the lane padding of the logits.
    return out[:, :K]


def reference_forward(x_nchw, params):
    """Pure-JAX reference of the wrapped module on the full batch, with the
    same bf16 rounding of inputs / conv weights as the kernel path."""
    wc, bc, wf, bf = params
    x = jnp.transpose(x_nchw, (0, 2, 3, 1))
    x = x.astype(jnp.bfloat16).astype(jnp.float32)
    wc_q = wc.astype(jnp.bfloat16).astype(jnp.float32)
    y = lax.conv_general_dilated(
        x, wc_q, window_strides=(1, 1), padding="SAME",
        dimension_numbers=("NHWC", "HWIO", "NHWC"))
    y = jnp.maximum(y + bc[0], 0.0)
    feat = jnp.mean(y, axis=(1, 2))
    return feat @ wf + bf[0]


def init_params(key, c_in=4, f=8, k=10):
    k1, k2, k3, k4 = jax.random.split(key, 4)
    wc = 0.1 * jax.random.normal(k1, (3, 3, c_in, f), jnp.float32)
    bc = 0.1 * jax.random.normal(k2, (1, f), jnp.float32)
    wf = 0.1 * jax.random.normal(k3, (f, k), jnp.float32)
    bf = 0.1 * jax.random.normal(k4, (1, k), jnp.float32)
    return wc, bc, wf, bf


if __name__ == "__main__":
    key = jax.random.PRNGKey(0)
    kx, kp = jax.random.split(key)

    N, C, H, W = 2, 4, 16, 16          # NCHW like PyTorch; 2 "devices"
    x = jax.random.normal(kx, (N, C, H, W), jnp.float32)
    params = init_params(kp, c_in=C, f=8, k=10)

    out = jax.block_until_ready(data_parallel_forward(x, params, n_dev=2))
    ref = jax.block_until_ready(reference_forward(x, params))

    assert out.shape == (N, 10)
    assert np.allclose(np.asarray(out), np.asarray(ref), atol=5e-3, rtol=5e-3)

    # TODO(synk): DataParallel's multi-GPU replication/streams and the
    # training-side closure()/prepare_batch() helpers have no Pallas
    # analogue; the scatter/gather is the identity for weight-shared
    # replicas and is collapsed into a batch-tiled, "parallel" grid.
    print("KERNEL_OK")
</pallas_src>

<mosaic_0001>
module attributes {stable_mosaic.version = 11 : i64} {
  func.func @_replica_kernel(%arg0: i32, %arg1: memref<2x256x36xbf16, #tpu.memory_space<vmem>>, %arg2: memref<36x128xbf16, #tpu.memory_space<vmem>>, %arg3: memref<1x128xf32, #tpu.memory_space<vmem>>, %arg4: memref<128x128xf32, #tpu.memory_space<vmem>>, %arg5: memref<1x128xf32, #tpu.memory_space<vmem>>, %arg6: memref<2x128xf32, #tpu.memory_space<vmem>>) attributes {dimension_semantics = [#tpu.dimension_semantics<parallel>], iteration_bounds = array<i64: 1>, scalar_prefetch = 0 : i64, scratch_operands = 0 : i64, tpu.core_type = #tpu.core_type<tc>, window_params = [{transform_indices = @transform_0, window_bounds = array<i64: 2, 256, 36>}, {pipeline_mode = #tpu.pipeline_mode<synchronous>, transform_indices = @transform_1, window_bounds = array<i64: 36, 128>}, {pipeline_mode = #tpu.pipeline_mode<synchronous>, transform_indices = @transform_2, window_bounds = array<i64: 1, 128>}, {pipeline_mode = #tpu.pipeline_mode<synchronous>, transform_indices = @transform_3, window_bounds = array<i64: 128, 128>}, {pipeline_mode = #tpu.pipeline_mode<synchronous>, transform_indices = @transform_4, window_bounds = array<i64: 1, 128>}, {transform_indices = @transform_5, window_bounds = array<i64: 2, 128>}]} {
    %c0 = arith.constant 0 : index
    %c0_0 = arith.constant 0 : index
    %c0_1 = arith.constant 0 : index
    %0 = vector.load %arg1[%c0, %c0_0, %c0_1] : memref<2x256x36xbf16, #tpu.memory_space<vmem>>, vector<2x256x36xbf16>
    %1 = vector.shape_cast %0 : vector<2x256x36xbf16> to vector<512x36xbf16>
    %c0_2 = arith.constant 0 : index
    %c0_3 = arith.constant 0 : index
    %2 = vector.load %arg2[%c0_2, %c0_3] : memref<36x128xbf16, #tpu.memory_space<vmem>>, vector<36x128xbf16>
    %cst = arith.constant dense<0.000000e+00> : vector<512x128xf32>
    %3 = tpu.matmul %1, %2, %cst {dimension_numbers = #tpu.dot_dimension_numbers<[1], [0], [0], [1], [0, 0, 1, 1], [], []>} : vector<512x36xbf16>, vector<36x128xbf16>, vector<512x128xf32> -> vector<512x128xf32>
    %c0_4 = arith.constant 0 : index
    %c0_5 = arith.constant 0 : index
    %4 = vector.load %arg3[%c0_4, %c0_5] : memref<1x128xf32, #tpu.memory_space<vmem>>, vector<1x128xf32>
    %5 = vector.broadcast %4 : vector<1x128xf32> to vector<512x128xf32>
    %6 = arith.addf %3, %5 : vector<512x128xf32>
    %cst_6 = arith.constant 0.000000e+00 : f32
    %7 = vector.broadcast %cst_6 : f32 to vector<512x128xf32>
    %8 = arith.maximumf %6, %7 : vector<512x128xf32>
    %9 = vector.shape_cast %8 : vector<512x128xf32> to vector<2x256x128xf32>
    %cst_7 = arith.constant dense<0.000000e+00> : vector<2x128xf32>
    %10 = vector.multi_reduction <add>, %9, %cst_7 [1] : vector<2x256x128xf32> to vector<2x128xf32>
    %c0_8 = arith.constant 0 : index
    %c0_9 = arith.constant 0 : index
    %11 = vector.load %arg4[%c0_8, %c0_9] : memref<128x128xf32, #tpu.memory_space<vmem>>, vector<128x128xf32>
    %cst_10 = arith.constant dense<0.000000e+00> : vector<2x128xf32>
    %12 = tpu.matmul %10, %11, %cst_10 {dimension_numbers = #tpu.dot_dimension_numbers<[1], [0], [0], [1], [0, 0, 1, 1], [], []>} : vector<2x128xf32>, vector<128x128xf32>, vector<2x128xf32> -> vector<2x128xf32>
    %c0_11 = arith.constant 0 : index
    %c0_12 = arith.constant 0 : index
    %13 = vector.load %arg5[%c0_11, %c0_12] : memref<1x128xf32, #tpu.memory_space<vmem>>, vector<1x128xf32>
    %14 = vector.broadcast %13 : vector<1x128xf32> to vector<2x128xf32>
    %15 = arith.addf %12, %14 : vector<2x128xf32>
    %c0_13 = arith.constant 0 : index
    %c0_14 = arith.constant 0 : index
    %16 = vector.load %arg6[%c0_13, %c0_14] : memref<2x128xf32, #tpu.memory_space<vmem>>, vector<2x128xf32>
    tpu.vector_store %arg6[%c0_13, %c0_14], %15 {strides = array<i32>} : memref<2x128xf32, #tpu.memory_space<vmem>>, vector<2x128xf32>,
    return
  }
  func.func @transform_0(%arg0: i32) -> (i32, i32, i32) {
    %c0_i32 = arith.constant 0 : i32
    %c0_i32_0 = arith.constant 0 : i32
    %c0_i32_1 = arith.constant 0 : i32
    return %arg0, %c0_i32, %c0_i32_0 : i32, i32, i32
  }
  func.func @transform_1(%arg0: i32) -> (i32, i32) {
    %c0_i32 = arith.constant 0 : i32
    %c0_i32_0 = arith.constant 0 : i32
    %c0_i32_1 = arith.constant 0 : i32
    return %c0_i32, %c0_i32_0 : i32, i32
  }
  func.func @transform_2(%arg0: i32) -> (i32, i32) {
    %c0_i32 = arith.constant 0 : i32
    %c0_i32_0 = arith.constant 0 : i32
    %c0_i32_1 = arith.constant 0 : i32
    return %c0_i32, %c0_i32_0 : i32, i32
  }
  func.func @transform_3(%arg0: i32) -> (i32, i32) {
    %c0_i32 = arith.constant 0 : i32
    %c0_i32_0 = arith.constant 0 : i32
    %c0_i32_1 = arith.constant 0 : i32
    return %c0_i32, %c0_i32_0 : i32, i32
  }
  func.func @transform_4(%arg0: i32) -> (i32, i32) {
    %c0_i32 = arith.constant 0 : i32
    %c0_i32_0 = arith.constant 0 : i32
    %c0_i32_1 = arith.constant 0 : i32
    return %c0_i32, %c0_i32_0 : i32, i32
  }
  func.func @transform_5(%arg0: i32) -> (i32, i32) {
    %c0_i32 = arith.constant 0 : i32
    %c0_i32_0 = arith.constant 0 : i32
    return %arg0, %c0_i32 : i32, i32
  }
}

</mosaic_0001>

<llo_original>
// kernel: data_parallel_forward.1
$region0: #{data_parallel_forward.1}
  #allocation0 [shape = 'u32[]', space=smem, size = 0x4, offset = 0x4, fixed_abs, tag = 'smem constant byte address 0x4 - core index']
  #allocation1 [shape = 'u32[144,128]{1,0:T(1,128)}', space=vmem, size = 0x12000, scoped, tag = 'internal scratch']
  %s0 = inlined_call_operand.vmem [shape: bf16[2,256,36], index: 0, kind: input, shape index: {}]
  %s1 = inlined_call_operand.vmem [shape: bf16[36,128], index: 1, kind: input, shape index: {}]
  %s2 = inlined_call_operand.vmem [shape: f32[1,128], index: 2, kind: input, shape index: {}]
  %s3 = inlined_call_operand.vmem [shape: f32[128,128], index: 3, kind: input, shape index: {}]
  %s4 = inlined_call_operand.vmem [shape: f32[1,128], index: 4, kind: input, shape index: {}]
  %s5 = inlined_call_operand.hbm [shape: f32[2,128], index: 5, kind: output, shape index: {}]
  %s6 = sld [smem:[#allocation0]]
  $region30: #{data_parallel_forward.1} parent=0
    _
  %s8 = ssub.s32 1, %s6
  %s9 = scalar_select 0, %s8, %s6
  $region1: #{data_parallel_forward.1} parent=0
    #allocation2 [shape = 'u8[1024]{0}', space=vmem, size = 0x400, scoped, tag = 'output window, operand 0, single buffered']
    #allocation3 [shape = 's32[1]{0}', space=sflag, size = 0x4, scoped, tag = 'scoped memory for data_parallel_forward.1']
    %10 = vsyncpa [#allocation3], 0
    // Predicated region
    $region2: #{data_parallel_forward.1} parent=1 // pred_check
      _
    $region3: #{data_parallel_forward.1} parent=1 // pred_check_branch
      %12 = sbr.rel (0) target = $region5
    $region4: #{data_parallel_forward.1} parent=1 // pred_region
      _
    $region5: #{data_parallel_forward.1} parent=1 // pred_fallthru
      _
    // Predicated region
    $region6: #{data_parallel_forward.1} parent=1 // pred_check
      _
    $region7: #{data_parallel_forward.1} parent=1 // pred_check_branch
      %14 = sbr.rel (0) target = $region9
    $region8: #{data_parallel_forward.1} parent=1 // pred_region
      _
    $region9: #{data_parallel_forward.1} parent=1 // pred_fallthru
      _
    // Predicated region
    $region10: #{data_parallel_forward.1} parent=1 // pred_check
      _
    $region11: #{data_parallel_forward.1} parent=1 // pred_check_branch
      %16 = sbr.rel (0) target = $region13
    $region12: #{data_parallel_forward.1} parent=1 // pred_region
      _
    $region13: #{data_parallel_forward.1} parent=1 // pred_fallthru
      _
    // Predicated region
    $region14: #{data_parallel_forward.1} parent=1 // pred_check
      _
    $region15: #{data_parallel_forward.1} parent=1 // pred_check_branch
      %18 = sbr.rel (0) target = $region17
    $region16: #{data_parallel_forward.1} parent=1 // pred_region
      _
    $region17: #{data_parallel_forward.1} parent=1 // pred_fallthru
      _
    // Predicated region
    $region18: #{data_parallel_forward.1} parent=1 // pred_check
      _
    $region19: #{data_parallel_forward.1} parent=1 // pred_check_branch
      %20 = sbr.rel (0) target = $region21
    $region20: #{data_parallel_forward.1} parent=1 // pred_region
      _
    $region21: #{data_parallel_forward.1} parent=1 // pred_fallthru
      _
    %v22 = vld [vmem:[%s0] sm:$0xf]
    %v23 = vld [vmem:[%s0 + $0x4] sm:$0xf]
    %v24 = vld [vmem:[%s0 + $0x8] sm:$0xf]
    %v25 = vld [vmem:[%s0 + $0xc] sm:$0xf]
    %v26 = vld [vmem:[%s0 + $0x10] sm:$0xf]
    %v27 = vld [vmem:[%s0 + $0x14] sm:$0xf]
    %v28 = vld [vmem:[%s0 + $0x18] sm:$0xf]
    %v29 = vld [vmem:[%s0 + $0x1c] sm:$0xf]
    %v30 = vld [vmem:[%s0 + $0x20] sm:$0xf]
    %v31 = vld [vmem:[%s0 + $0x24] sm:$0xf]
    %v32 = vld [vmem:[%s0 + $0x28] sm:$0xf]
    %v33 = vld [vmem:[%s0 + $0x2c] sm:$0xf]
    %v34 = vld [vmem:[%s0 + $0x30] sm:$0xf]
    %v35 = vld [vmem:[%s0 + $0x34] sm:$0xf]
    %v36 = vld [vmem:[%s0 + $0x38] sm:$0xf]
    %v37 = vld [vmem:[%s0 + $0x3c] sm:$0xf]
    %v38 = vld [vmem:[%s0 + $0x40] sm:$0xf]
    %v39 = vld [vmem:[%s0 + $0x44] sm:$0xf]
    %v40 = vld [vmem:[%s0 + $0x48] sm:$0xf]
    %v41 = vld [vmem:[%s0 + $0x4c] sm:$0xf]
    %v42 = vld [vmem:[%s0 + $0x50] sm:$0xf]
    %v43 = vld [vmem:[%s0 + $0x54] sm:$0xf]
    %v44 = vld [vmem:[%s0 + $0x58] sm:$0xf]
    %v45 = vld [vmem:[%s0 + $0x5c] sm:$0xf]
    %v46 = vld [vmem:[%s0 + $0x60] sm:$0xf]
    %v47 = vld [vmem:[%s0 + $0x64] sm:$0xf]
    %v48 = vld [vmem:[%s0 + $0x68] sm:$0xf]
    %v49 = vld [vmem:[%s0 + $0x6c] sm:$0xf]
    %v50 = vld [vmem:[%s0 + $0x70] sm:$0xf]
    %v51 = vld [vmem:[%s0 + $0x74] sm:$0xf]
    %v52 = vld [vmem:[%s0 + $0x78] sm:$0xf]
    %v53 = vld [vmem:[%s0 + $0x7c] sm:$0xf]
    %v54 = vld [vmem:[%s0 + $0x80] sm:$0xf]
    %v55 = vld [vmem:[%s0 + $0x84] sm:$0xf]
    %v56 = vld [vmem:[%s0 + $0x88] sm:$0xf]
    %v57 = vld [vmem:[%s0 + $0x8c] sm:$0xf]
    %v58 = vld [vmem:[%s0 + $0x90] sm:$0xf]
    %v59 = vld [vmem:[%s0 + $0x94] sm:$0xf]
    %v60 = vld [vmem:[%s0 + $0x98] sm:$0xf]
    %v61 = vld [vmem:[%s0 + $0x9c] sm:$0xf]
    %v62 = vld [vmem:[%s0 + $0xa0] sm:$0xf]
    %v63 = vld [vmem:[%s0 + $0xa4] sm:$0xf]
    %v64 = vld [vmem:[%s0 + $0xa8] sm:$0xf]
    %v65 = vld [vmem:[%s0 + $0xac] sm:$0xf]
    %v66 = vld [vmem:[%s0 + $0xb0] sm:$0xf]
    %v67 = vld [vmem:[%s0 + $0xb4] sm:$0xf]
    %v68 = vld [vmem:[%s0 + $0xb8] sm:$0xf]
    %v69 = vld [vmem:[%s0 + $0xbc] sm:$0xf]
    %v70 = vld [vmem:[%s0 + $0xc0] sm:$0xf]
    %v71 = vld [vmem:[%s0 + $0xc4] sm:$0xf]
    %v72 = vld [vmem:[%s0 + $0xc8] sm:$0xf]
    %v73 = vld [vmem:[%s0 + $0xcc] sm:$0xf]
    %v74 = vld [vmem:[%s0 + $0xd0] sm:$0xf]
    %v75 = vld [vmem:[%s0 + $0xd4] sm:$0xf]
    %v76 = vld [vmem:[%s0 + $0xd8] sm:$0xf]
    %v77 = vld [vmem:[%s0 + $0xdc] sm:$0xf]
    %v78 = vld [vmem:[%s0 + $0xe0] sm:$0xf]
    %v79 = vld [vmem:[%s0 + $0xe4] sm:$0xf]
    %v80 = vld [vmem:[%s0 + $0xe8] sm:$0xf]
    %v81 = vld [vmem:[%s0 + $0xec] sm:$0xf]
    %v82 = vld [vmem:[%s0 + $0xf0] sm:$0xf]
    %v83 = vld [vmem:[%s0 + $0xf4] sm:$0xf]
    %v84 = vld [vmem:[%s0 + $0xf8] sm:$0xf]
    %v85 = vld [vmem:[%s0 + $0xfc] sm:$0xf]
    %v86 = vld [vmem:[%s1] sm:$0xf]
    %v87 = vld [vmem:[%s1 + $0x4] sm:$0xf]
    %v88 = vld [vmem:[%s1 + $0x8] sm:$0xf]
    %v89 = vld [vmem:[%s1 + $0xc] sm:$0xf]
    %v90 = vld [vmem:[%s1 + $0x10] sm:$0x3]
    %v91 = vld [vmem:[%s2] sm:$0x1]
    %v93 = vlaneseq
    %v94 = vshrl.u32 %v93, 7
    %v95 = vsub.s32 0, %v94
    %v96 = vrot.slane %v91, %v95
    %v162 = vunpack.c.l.b16 %v22
    %v163 = vunpack.c.l.b16 %v23
    %v164 = vunpack.c.l.b16 %v24
    %v165 = vunpack.c.l.b16 %v25
    %v166 = vunpack.c.l.b16 %v26
    %v167 = vunpack.c.l.b16 %v27
    %v168 = vunpack.c.l.b16 %v28
    %v169 = vunpack.c.l.b16 %v29
    %v170 = vunpack.c.l.b16 %v30
    %v171 = vunpack.c.l.b16 %v31
    %v172 = vunpack.c.l.b16 %v32
    %v173 = vunpack.c.l.b16 %v33
    %v174 = vunpack.c.l.b16 %v34
    %v175 = vunpack.c.l.b16 %v35
    %v176 = vunpack.c.l.b16 %v36
    %v177 = vunpack.c.l.b16 %v37
    %v178 = vunpack.c.l.b16 %v38
    %v179 = vunpack.c.l.b16 %v39
    %v180 = vunpack.c.l.b16 %v40
    %v181 = vunpack.c.l.b16 %v41
    %v182 = vunpack.c.l.b16 %v42
    %v183 = vunpack.c.l.b16 %v43
    %v184 = vunpack.c.l.b16 %v44
    %v185 = vunpack.c.l.b16 %v45
    %v186 = vunpack.c.l.b16 %v46
    %v187 = vunpack.c.l.b16 %v47
    %v188 = vunpack.c.l.b16 %v48
    %v189 = vunpack.c.l.b16 %v49
    %v190 = vunpack.c.l.b16 %v50
    %v191 = vunpack.c.l.b16 %v51
    %v192 = vunpack.c.l.b16 %v52
    %v193 = vunpack.c.l.b16 %v53
    %v194 = vunpack.c.l.b16 %v54
    %v195 = vunpack.c.l.b16 %v55
    %v196 = vunpack.c.l.b16 %v56
    %v197 = vunpack.c.l.b16 %v57
    %v198 = vunpack.c.l.b16 %v58
    %v199 = vunpack.c.l.b16 %v59
    %v200 = vunpack.c.l.b16 %v60
    %v201 = vunpack.c.l.b16 %v61
    %v202 = vunpack.c.l.b16 %v62
    %v203 = vunpack.c.l.b16 %v63
    %v204 = vunpack.c.l.b16 %v64
    %v205 = vunpack.c.l.b16 %v65
    %v206 = vunpack.c.l.b16 %v66
    %v207 = vunpack.c.l.b16 %v67
    %v208 = vunpack.c.l.b16 %v68
    %v209 = vunpack.c.l.b16 %v69
    %v210 = vunpack.c.l.b16 %v70
    %v211 = vunpack.c.l.b16 %v71
    %v212 = vunpack.c.l.b16 %v72
    %v213 = vunpack.c.l.b16 %v73
    %v214 = vunpack.c.l.b16 %v74
    %v215 = vunpack.c.l.b16 %v75
    %v216 = vunpack.c.l.b16 %v76
    %v217 = vunpack.c.l.b16 %v77
    %v218 = vunpack.c.l.b16 %v78
    %v219 = vunpack.c.l.b16 %v79
    %v220 = vunpack.c.l.b16 %v80
    %v221 = vunpack.c.l.b16 %v81
    %v222 = vunpack.c.l.b16 %v82
    %v223 = vunpack.c.l.b16 %v83
    %v224 = vunpack.c.l.b16 %v84
    %v225 = vunpack.c.l.b16 %v85
    %v226 = vpack.c.b16 %v163, %v162
    %v227 = vpack.c.b16 %v165, %v164
    %v228 = vpack.c.b16 %v167, %v166
    %v229 = vpack.c.b16 %v169, %v168
    %v230 = vpack.c.b16 %v171, %v170
    %v231 = vpack.c.b16 %v173, %v172
    %v232 = vpack.c.b16 %v175, %v174
    %v233 = vpack.c.b16 %v177, %v176
    %v234 = vpack.c.b16 %v179, %v178
    %v235 = vpack.c.b16 %v181, %v180
    %v236 = vpack.c.b16 %v183, %v182
    %v237 = vpack.c.b16 %v185, %v184
    %v238 = vpack.c.b16 %v187, %v186
    %v239 = vpack.c.b16 %v189, %v188
    %v240 = vpack.c.b16 %v191, %v190
    %v241 = vpack.c.b16 %v193, %v192
    %v242 = vpack.c.b16 %v195, %v194
    %v243 = vpack.c.b16 %v197, %v196
    %v244 = vpack.c.b16 %v199, %v198
    %v245 = vpack.c.b16 %v201, %v200
    %v246 = vpack.c.b16 %v203, %v202
    %v247 = vpack.c.b16 %v205, %v204
    %v248 = vpack.c.b16 %v207, %v206
    %v249 = vpack.c.b16 %v209, %v208
    %v250 = vpack.c.b16 %v211, %v210
    %v251 = vpack.c.b16 %v213, %v212
    %v252 = vpack.c.b16 %v215, %v214
    %v253 = vpack.c.b16 %v217, %v216
    %v254 = vpack.c.b16 %v219, %v218
    %v255 = vpack.c.b16 %v221, %v220
    %v256 = vpack.c.b16 %v223, %v222
    %v257 = vpack.c.b16 %v225, %v224
    %v263 = vunpack.c.l.b16 %v86
    %v264 = vunpack.c.l.b16 %v87
    %v265 = vunpack.c.l.b16 %v88
    %v266 = vunpack.c.l.b16 %v89
    %v267 = vunpack.c.l.b16 %v90
    %v268 = vpack.c.b16 %v264, %v263
    %v269 = vpack.c.b16 %v266, %v265
    %v270 = vpack.c.b16 %v267, %v267
    %vm273 = vcmask 293888
    %v275 = vsel %vm273, %v226, 0
    %v278 = vsel %vm273, %v227, 0
    %v281 = vsel %vm273, %v228, 0
    %v284 = vsel %vm273, %v229, 0
    %v287 = vsel %vm273, %v230, 0
    %v290 = vsel %vm273, %v231, 0
    %v293 = vsel %vm273, %v232, 0
    %v296 = vsel %vm273, %v233, 0
    %v299 = vsel %vm273, %v234, 0
    %v302 = vsel %vm273, %v235, 0
    %v305 = vsel %vm273, %v236, 0
    %v308 = vsel %vm273, %v237, 0
    %v311 = vsel %vm273, %v238, 0
    %v314 = vsel %vm273, %v239, 0
    %v317 = vsel %vm273, %v240, 0
    %v320 = vsel %vm273, %v241, 0
    %v323 = vsel %vm273, %v242, 0
    %v326 = vsel %vm273, %v243, 0
    %v329 = vsel %vm273, %v244, 0
    %v332 = vsel %vm273, %v245, 0
    %v335 = vsel %vm273, %v246, 0
    %v338 = vsel %vm273, %v247, 0
    %v341 = vsel %vm273, %v248, 0
    %v344 = vsel %vm273, %v249, 0
    %v347 = vsel %vm273, %v250, 0
    %v350 = vsel %vm273, %v251, 0
    %v353 = vsel %vm273, %v252, 0
    %v356 = vsel %vm273, %v253, 0
    %v359 = vsel %vm273, %v254, 0
    %v362 = vsel %vm273, %v255, 0
    %v365 = vsel %vm273, %v256, 0
    %v368 = vsel %vm273, %v257, 0
    %vm370 = vcmask 1041408
    %v372 = vsel %vm370, %v270, 0
    %374 = vmatprep.subr.bf16.mxu0 0
    %375 = vmatpush1.bf16.msra.mxu0 %v268
    %376 = vmatprep.subr.bf16.mxu0 0
    %377 = vmatpush1.bf16.msra.mxu0 %v269
    %378 = vmatprep.subr.bf16.mxu0 0
    %379 = vmatpush1.bf16.msra.mxu0 %v372
    %380 = vmatprep.subr.bf16.mxu0 0
    %381 = vmatpush1.bf16.msra.mxu0 0
    %382 = vmatprep.subr.bf16.mxu0 0
    %383 = vmatpush1.bf16.msra.mxu0 0
    %384 = vmatprep.subr.bf16.mxu0 0
    %385 = vmatpush1.bf16.msra.mxu0 0
    %386 = vmatprep.subr.bf16.mxu0 0
    %387 = vmatpush1.bf16.msra.mxu0 0
    %388 = vmatprep.subr.bf16.mxu0 0
    %389 = vmatpush1.bf16.msra.mxu0 0
    %390 = vmatprep.subr.bf16.mxu0 0
    %391 = vmatpush1.bf16.msra.mxu0 0
    %392 = vmatprep.subr.bf16.mxu0 0
    %393 = vmatpush1.bf16.msra.mxu0 0
    %394 = vmatprep.subr.bf16.mxu0 0
    %395 = vmatpush1.bf16.msra.mxu0 0
    %396 = vmatprep.subr.bf16.mxu0 0
    %397 = vmatpush1.bf16.msra.mxu0 0
    %398 = vmatprep.subr.bf16.mxu0 0
    %399 = vmatpush1.bf16.msra.mxu0 0
    %400 = vmatprep.subr.bf16.mxu0 0
    %401 = vmatpush1.bf16.msra.mxu0 0
    %402 = vmatprep.subr.bf16.mxu0 0
    %403 = vmatpush1.bf16.msra.mxu0 0
    %404 = vmatprep.subr.bf16.mxu0 0
    %405 = vmatpush1.bf16.msra.mxu0 0
    %406 = vmatprep.mubr.bf16.mxu0 0
    %407 = vmatmul.mubr.bf16.gmra.mrb[0].mxu0 %v275
    %v408 = vpop.f32.mrb[0].mxu0
    %v409 = vadd.f32 %v96, %v408
    %v410 = vpop.f32.mrb[0].mxu0
    %v411 = vpop.f32.mrb[0].mxu0
    %v412 = vadd.f32 %v96, %v411
    %v413 = vpop.f32.mrb[0].mxu0
    %414 = vmatprep.mubr.bf16.mxu0 0
    %415 = vmatmul.mubr.bf16.gmra.mrb[0].mxu0 %v278
    %v416 = vpop.f32.mrb[0].mxu0
    %v417 = vadd.f32 %v96, %v416
    %v418 = vpop.f32.mrb[0].mxu0
    %v419 = vpop.f32.mrb[0].mxu0
    %v420 = vadd.f32 %v96, %v419
    %v421 = vpop.f32.mrb[0].mxu0
    %422 = vmatprep.mubr.bf16.mxu0 0
    %423 = vmatmul.mubr.bf16.gmra.mrb[0].mxu0 %v281
    %v424 = vpop.f32.mrb[0].mxu0
    %v425 = vadd.f32 %v96, %v424
    %v426 = vpop.f32.mrb[0].mxu0
    %v427 = vpop.f32.mrb[0].mxu0
    %v428 = vadd.f32 %v96, %v427
    %v429 = vpop.f32.mrb[0].mxu0
    %430 = vmatprep.mubr.bf16.mxu0 0
    %431 = vmatmul.mubr.bf16.gmra.mrb[0].mxu0 %v284
    %v432 = vpop.f32.mrb[0].mxu0
    %v433 = vadd.f32 %v96, %v432
    %v434 = vpop.f32.mrb[0].mxu0
    %v435 = vpop.f32.mrb[0].mxu0
    %v436 = vadd.f32 %v96, %v435
    %v437 = vpop.f32.mrb[0].mxu0
    %438 = vmatprep.mubr.bf16.mxu0 0
    %439 = vmatmul.mubr.bf16.gmra.mrb[0].mxu0 %v287
    %v440 = vpop.f32.mrb[0].mxu0
    %v441 = vadd.f32 %v96, %v440
    %v442 = vpop.f32.mrb[0].mxu0
    %v443 = vpop.f32.mrb[0].mxu0
    %v444 = vadd.f32 %v96, %v443
    %v445 = vpop.f32.mrb[0].mxu0
    %446 = vmatprep.mubr.bf16.mxu0 0
    %447 = vmatmul.mubr.bf16.gmra.mrb[0].mxu0 %v290
    %v448 = vpop.f32.mrb[0].mxu0
    %v449 = vadd.f32 %v96, %v448
    %v450 = vpop.f32.mrb[0].mxu0
    %v451 = vpop.f32.mrb[0].mxu0
    %v452 = vadd.f32 %v96, %v451
    %v453 = vpop.f32.mrb[0].mxu0
    %454 = vmatprep.mubr.bf16.mxu0 0
    %455 = vmatmul.mubr.bf16.gmra.mrb[0].mxu0 %v293
    %v456 = vpop.f32.mrb[0].mxu0
    %v457 = vadd.f32 %v96, %v456
    %v458 = vpop.f32.mrb[0].mxu0
    %v459 = vpop.f32.mrb[0].mxu0
    %v460 = vadd.f32 %v96, %v459
    %v461 = vpop.f32.mrb[0].mxu0
    %462 = vmatprep.mubr.bf16.mxu0 0
    %463 = vmatmul.mubr.bf16.gmra.mrb[0].mxu0 %v296
    %v464 = vpop.f32.mrb[0].mxu0
    %v465 = vadd.f32 %v96, %v464
    %v466 = vpop.f32.mrb[0].mxu0
    %v467 = vpop.f32.mrb[0].mxu0
    %v468 = vadd.f32 %v96, %v467
    %v469 = vpop.f32.mrb[0].mxu0
    %470 = vmatprep.mubr.bf16.mxu0 0
    %471 = vmatmul.mubr.bf16.gmra.mrb[0].mxu0 %v299
    %v472 = vpop.f32.mrb[0].mxu0
    %v473 = vadd.f32 %v96, %v472
    %v474 = vpop.f32.mrb[0].mxu0
    %v475 = vpop.f32.mrb[0].mxu0
    %v476 = vadd.f32 %v96, %v475
    %v477 = vpop.f32.mrb[0].mxu0
    %478 = vmatprep.mubr.bf16.mxu0 0
    %479 = vmatmul.mubr.bf16.gmra.mrb[0].mxu0 %v302
    %v480 = vpop.f32.mrb[0].mxu0
    %v481 = vadd.f32 %v96, %v480
    %v482 = vpop.f32.mrb[0].mxu0
    %v483 = vpop.f32.mrb[0].mxu0
    %v484 = vadd.f32 %v96, %v483
    %v485 = vpop.f32.mrb[0].mxu0
    %486 = vmatprep.mubr.bf16.mxu0 0
    %487 = vmatmul.mubr.bf16.gmra.mrb[0].mxu0 %v305
    %v488 = vpop.f32.mrb[0].mxu0
    %v489 = vadd.f32 %v96, %v488
    %v490 = vpop.f32.mrb[0].mxu0
    %v491 = vpop.f32.mrb[0].mxu0
    %v492 = vadd.f32 %v96, %v491
    %v493 = vpop.f32.mrb[0].mxu0
    %494 = vmatprep.mubr.bf16.mxu0 0
    %495 = vmatmul.mubr.bf16.gmra.mrb[0].mxu0 %v308
    %v496 = vpop.f32.mrb[0].mxu0
    %v497 = vadd.f32 %v96, %v496
    %v498 = vpop.f32.mrb[0].mxu0
    %v499 = vpop.f32.mrb[0].mxu0
    %v500 = vadd.f32 %v96, %v499
    %v501 = vpop.f32.mrb[0].mxu0
    %502 = vmatprep.mubr.bf16.mxu0 0
    %503 = vmatmul.mubr.bf16.gmra.mrb[0].mxu0 %v311
    %v504 = vpop.f32.mrb[0].mxu0
    %v505 = vadd.f32 %v96, %v504
    %v506 = vpop.f32.mrb[0].mxu0
    %v507 = vpop.f32.mrb[0].mxu0
    %v508 = vadd.f32 %v96, %v507
    %v509 = vpop.f32.mrb[0].mxu0
    %510 = vmatprep.mubr.bf16.mxu0 0
    %511 = vmatmul.mubr.bf16.gmra.mrb[0].mxu0 %v314
    %v512 = vpop.f32.mrb[0].mxu0
    %v513 = vadd.f32 %v96, %v512
    %v514 = vpop.f32.mrb[0].mxu0
    %v515 = vpop.f32.mrb[0].mxu0
    %v516 = vadd.f32 %v96, %v515
    %v517 = vpop.f32.mrb[0].mxu0
    %518 = vmatprep.mubr.bf16.mxu0 0
    %519 = vmatmul.mubr.bf16.gmra.mrb[0].mxu0 %v317
    %v520 = vpop.f32.mrb[0].mxu0
    %v521 = vadd.f32 %v96, %v520
    %v522 = vpop.f32.mrb[0].mxu0
    %v523 = vpop.f32.mrb[0].mxu0
    %v524 = vadd.f32 %v96, %v523
    %v525 = vpop.f32.mrb[0].mxu0
    %526 = vmatprep.mubr.bf16.mxu0 0
    %527 = vmatmul.mubr.bf16.gmra.mrb[0].mxu0 %v320
    %v528 = vpop.f32.mrb[0].mxu0
    %v529 = vadd.f32 %v96, %v528
    %v530 = vpop.f32.mrb[0].mxu0
    %v531 = vpop.f32.mrb[0].mxu0
    %v532 = vadd.f32 %v96, %v531
    %v533 = vpop.f32.mrb[0].mxu0
    %534 = vmatprep.mubr.bf16.mxu0 0
    %535 = vmatmul.mubr.bf16.gmra.mrb[0].mxu0 %v323
    %v536 = vpop.f32.mrb[0].mxu0
    %v537 = vadd.f32 %v96, %v536
    %v538 = vpop.f32.mrb[0].mxu0
    %v539 = vpop.f32.mrb[0].mxu0
    %v540 = vadd.f32 %v96, %v539
    %v541 = vpop.f32.mrb[0].mxu0
    %542 = vmatprep.mubr.bf16.mxu0 0
    %543 = vmatmul.mubr.bf16.gmra.mrb[0].mxu0 %v326
    %v544 = vpop.f32.mrb[0].mxu0
    %v545 = vadd.f32 %v96, %v544
    %v546 = vpop.f32.mrb[0].mxu0
    %v547 = vpop.f32.mrb[0].mxu0
    %v548 = vadd.f32 %v96, %v547
    %v549 = vpop.f32.mrb[0].mxu0
    %550 = vmatprep.mubr.bf16.mxu0 0
    %551 = vmatmul.mubr.bf16.gmra.mrb[0].mxu0 %v329
    %v552 = vpop.f32.mrb[0].mxu0
    %v553 = vadd.f32 %v96, %v552
    %v554 = vpop.f32.mrb[0].mxu0
    %v555 = vpop.f32.mrb[0].mxu0
    %v556 = vadd.f32 %v96, %v555
    %v557 = vpop.f32.mrb[0].mxu0
    %558 = vmatprep.mubr.bf16.mxu0 0
    %559 = vmatmul.mubr.bf16.gmra.mrb[0].mxu0 %v332
    %v560 = vpop.f32.mrb[0].mxu0
    %v561 = vadd.f32 %v96, %v560
    %v562 = vpop.f32.mrb[0].mxu0
    %v563 = vpop.f32.mrb[0].mxu0
    %v564 = vadd.f32 %v96, %v563
    %v565 = vpop.f32.mrb[0].mxu0
    %566 = vmatprep.mubr.bf16.mxu0 0
    %567 = vmatmul.mubr.bf16.gmra.mrb[0].mxu0 %v335
    %v568 = vpop.f32.mrb[0].mxu0
    %v569 = vadd.f32 %v96, %v568
    %v570 = vpop.f32.mrb[0].mxu0
    %v571 = vpop.f32.mrb[0].mxu0
    %v572 = vadd.f32 %v96, %v571
    %v573 = vpop.f32.mrb[0].mxu0
    %574 = vmatprep.mubr.bf16.mxu0 0
    %575 = vmatmul.mubr.bf16.gmra.mrb[0].mxu0 %v338
    %v576 = vpop.f32.mrb[0].mxu0
    %v577 = vadd.f32 %v96, %v576
    %v578 = vpop.f32.mrb[0].mxu0
    %v579 = vpop.f32.mrb[0].mxu0
    %v580 = vadd.f32 %v96, %v579
    %v581 = vpop.f32.mrb[0].mxu0
    %582 = vmatprep.mubr.bf16.mxu0 0
    %583 = vmatmul.mubr.bf16.gmra.mrb[0].mxu0 %v341
    %v584 = vpop.f32.mrb[0].mxu0
    %v585 = vadd.f32 %v96, %v584
    %v586 = vpop.f32.mrb[0].mxu0
    %v587 = vpop.f32.mrb[0].mxu0
    %v588 = vadd.f32 %v96, %v587
    %v589 = vpop.f32.mrb[0].mxu0
    %590 = vmatprep.mubr.bf16.mxu0 0
    %591 = vmatmul.mubr.bf16.gmra.mrb[0].mxu0 %v344
    %v592 = vpop.f32.mrb[0].mxu0
    %v593 = vadd.f32 %v96, %v592
    %v594 = vpop.f32.mrb[0].mxu0
    %v595 = vpop.f32.mrb[0].mxu0
    %v596 = vadd.f32 %v96, %v595
    %v597 = vpop.f32.mrb[0].mxu0
    %598 = vmatprep.mubr.bf16.mxu0 0
    %599 = vmatmul.mubr.bf16.gmra.mrb[0].mxu0 %v347
    %v600 = vpop.f32.mrb[0].mxu0
    %v601 = vadd.f32 %v96, %v600
    %v602 = vpop.f32.mrb[0].mxu0
    %v603 = vpop.f32.mrb[0].mxu0
    %v604 = vadd.f32 %v96, %v603
    %v605 = vpop.f32.mrb[0].mxu0
    %606 = vmatprep.mubr.bf16.mxu0 0
    %607 = vmatmul.mubr.bf16.gmra.mrb[0].mxu0 %v350
    %v608 = vpop.f32.mrb[0].mxu0
    %v609 = vadd.f32 %v96, %v608
    %v610 = vpop.f32.mrb[0].mxu0
    %v611 = vpop.f32.mrb[0].mxu0
    %v612 = vadd.f32 %v96, %v611
    %v613 = vpop.f32.mrb[0].mxu0
    %614 = vmatprep.mubr.bf16.mxu0 0
    %615 = vmatmul.mubr.bf16.gmra.mrb[0].mxu0 %v353
    %v616 = vpop.f32.mrb[0].mxu0
    %v617 = vadd.f32 %v96, %v616
    %v618 = vpop.f32.mrb[0].mxu0
    %v619 = vpop.f32.mrb[0].mxu0
    %v620 = vadd.f32 %v96, %v619
    %v621 = vpop.f32.mrb[0].mxu0
    %622 = vmatprep.mubr.bf16.mxu0 0
    %623 = vmatmul.mubr.bf16.gmra.mrb[0].mxu0 %v356
    %v624 = vpop.f32.mrb[0].mxu0
    %v625 = vadd.f32 %v96, %v624
    %v626 = vpop.f32.mrb[0].mxu0
    %v627 = vpop.f32.mrb[0].mxu0
    %v628 = vadd.f32 %v96, %v627
    %v629 = vpop.f32.mrb[0].mxu0
    %630 = vmatprep.mubr.bf16.mxu0 0
    %631 = vmatmul.mubr.bf16.gmra.mrb[0].mxu0 %v359
    %v632 = vpop.f32.mrb[0].mxu0
    %v633 = vadd.f32 %v96, %v632
    %v634 = vpop.f32.mrb[0].mxu0
    %v635 = vpop.f32.mrb[0].mxu0
    %v636 = vadd.f32 %v96, %v635
    %v637 = vpop.f32.mrb[0].mxu0
    %638 = vmatprep.mubr.bf16.mxu0 0
    %639 = vmatmul.mubr.bf16.gmra.mrb[0].mxu0 %v362
    %v640 = vpop.f32.mrb[0].mxu0
    %v641 = vadd.f32 %v96, %v640
    %v642 = vpop.f32.mrb[0].mxu0
    %v643 = vpop.f32.mrb[0].mxu0
    %v644 = vadd.f32 %v96, %v643
    %v645 = vpop.f32.mrb[0].mxu0
    %646 = vmatprep.mubr.bf16.mxu0 0
    %647 = vmatmul.mubr.bf16.gmra.mrb[0].mxu0 %v365
    %v648 = vpop.f32.mrb[0].mxu0
    %v649 = vadd.f32 %v96, %v648
    %v650 = vpop.f32.mrb[0].mxu0
    %v651 = vpop.f32.mrb[0].mxu0
    %v652 = vadd.f32 %v96, %v651
    %v653 = vpop.f32.mrb[0].mxu0
    %654 = vmatprep.mubr.bf16.mxu0 0
    %655 = vmatmul.mubr.bf16.gmra.mrb[0].mxu0 %v368
    %v656 = vpop.f32.mrb[0].mxu0
    %v657 = vadd.f32 %v96, %v656
    %v658 = vpop.f32.mrb[0].mxu0
    %v659 = vpop.f32.mrb[0].mxu0
    %v660 = vadd.f32 %v96, %v659
    %v661 = vpop.f32.mrb[0].mxu0
    %662 = vdwg.mxu0
    %v663 = vmax.f32 %v409, 0.0
    %v664 = vmax.f32 %v412, 0.0
    %v665 = vmax.f32 %v417, 0.0
    %v666 = vmax.f32 %v420, 0.0
    %v667 = vmax.f32 %v425, 0.0
    %v668 = vmax.f32 %v428, 0.0
    %v669 = vmax.f32 %v433, 0.0
    %v670 = vmax.f32 %v436, 0.0
    %v671 = vmax.f32 %v441, 0.0
    %v672 = vmax.f32 %v444, 0.0
    %v673 = vmax.f32 %v449, 0.0
    %v674 = vmax.f32 %v452, 0.0
    %v675 = vmax.f32 %v457, 0.0
    %v676 = vmax.f32 %v460, 0.0
    %v677 = vmax.f32 %v465, 0.0
    %v678 = vmax.f32 %v468, 0.0
    %v679 = vmax.f32 %v473, 0.0
    %v680 = vmax.f32 %v476, 0.0
    %v681 = vmax.f32 %v481, 0.0
    %v682 = vmax.f32 %v484, 0.0
    %v683 = vmax.f32 %v489, 0.0
    %v684 = vmax.f32 %v492, 0.0
    %v685 = vmax.f32 %v497, 0.0
    %v686 = vmax.f32 %v500, 0.0
    %v687 = vmax.f32 %v505, 0.0
    %v688 = vmax.f32 %v508, 0.0
    %v689 = vmax.f32 %v513, 0.0
    %v690 = vmax.f32 %v516, 0.0
    %v691 = vmax.f32 %v521, 0.0
    %v692 = vmax.f32 %v524, 0.0
    %v693 = vmax.f32 %v529, 0.0
    %v694 = vmax.f32 %v532, 0.0
    %v695 = vmax.f32 %v537, 0.0
    %v696 = vmax.f32 %v540, 0.0
    %v697 = vmax.f32 %v545, 0.0
    %v698 = vmax.f32 %v548, 0.0
    %v699 = vmax.f32 %v553, 0.0
    %v700 = vmax.f32 %v556, 0.0
    %v701 = vmax.f32 %v561, 0.0
    %v702 = vmax.f32 %v564, 0.0
    %v703 = vmax.f32 %v569, 0.0
    %v704 = vmax.f32 %v572, 0.0
    %v705 = vmax.f32 %v577, 0.0
    %v706 = vmax.f32 %v580, 0.0
    %v707 = vmax.f32 %v585, 0.0
    %v708 = vmax.f32 %v588, 0.0
    %v709 = vmax.f32 %v593, 0.0
    %v710 = vmax.f32 %v596, 0.0
    %v711 = vmax.f32 %v601, 0.0
    %v712 = vmax.f32 %v604, 0.0
    %v713 = vmax.f32 %v609, 0.0
    %v714 = vmax.f32 %v612, 0.0
    %v715 = vmax.f32 %v617, 0.0
    %v716 = vmax.f32 %v620, 0.0
    %v717 = vmax.f32 %v625, 0.0
    %v718 = vmax.f32 %v628, 0.0
    %v719 = vmax.f32 %v633, 0.0
    %v720 = vmax.f32 %v636, 0.0
    %v721 = vmax.f32 %v641, 0.0
    %v722 = vmax.f32 %v644, 0.0
    %v723 = vmax.f32 %v649, 0.0
    %v724 = vmax.f32 %v652, 0.0
    %v725 = vmax.f32 %v657, 0.0
    %v726 = vmax.f32 %v660, 0.0
    %v727 = vadd.f32 %v663, %v664
    %v728 = vadd.f32 %v727, %v665
    %v729 = vadd.f32 %v728, %v666
    %v730 = vadd.f32 %v729, %v667
    %v731 = vadd.f32 %v730, %v668
    %v732 = vadd.f32 %v731, %v669
    %v733 = vadd.f32 %v732, %v670
    %v734 = vadd.f32 %v733, %v671
    %v735 = vadd.f32 %v734, %v672
    %v736 = vadd.f32 %v735, %v673
    %v737 = vadd.f32 %v736, %v674
    %v738 = vadd.f32 %v737, %v675
    %v739 = vadd.f32 %v738, %v676
    %v740 = vadd.f32 %v739, %v677
    %v741 = vadd.f32 %v740, %v678
    %v742 = vadd.f32 %v741, %v679
    %v743 = vadd.f32 %v742, %v680
    %v744 = vadd.f32 %v743, %v681
    %v745 = vadd.f32 %v744, %v682
    %v746 = vadd.f32 %v745, %v683
    %v747 = vadd.f32 %v746, %v684
    %v748 = vadd.f32 %v747, %v685
    %v749 = vadd.f32 %v748, %v686
    %v750 = vadd.f32 %v749, %v687
    %v751 = vadd.f32 %v750, %v688
    %v752 = vadd.f32 %v751, %v689
    %v753 = vadd.f32 %v752, %v690
    %v754 = vadd.f32 %v753, %v691
    %v755 = vadd.f32 %v754, %v692
    %v756 = vadd.f32 %v755, %v693
    %v757 = vadd.f32 %v756, %v694
    %v758 = vrot.slane %v757, 4
    %v759 = vadd.f32 %v757, %v758
    %v760 = vrot.slane %v759, 2
    %v761 = vadd.f32 %v759, %v760
    %v762 = vrot.slane %v761, 1
    %v763 = vadd.f32 %v761, %v762
    %v764 = vadd.f32 %v695, %v696
    %v765 = vadd.f32 %v764, %v697
    %v766 = vadd.f32 %v765, %v698
    %v767 = vadd.f32 %v766, %v699
    %v768 = vadd.f32 %v767, %v700
    %v769 = vadd.f32 %v768, %v701
    %v770 = vadd.f32 %v769, %v702
    %v771 = vadd.f32 %v770, %v703
    %v772 = vadd.f32 %v771, %v704
    %v773 = vadd.f32 %v772, %v705
    %v774 = vadd.f32 %v773, %v706
    %v775 = vadd.f32 %v774, %v707
    %v776 = vadd.f32 %v775, %v708
    %v777 = vadd.f32 %v776, %v709
    %v778 = vadd.f32 %v777, %v710
    %v779 = vadd.f32 %v778, %v711
    %v780 = vadd.f32 %v779, %v712
    %v781 = vadd.f32 %v780, %v713
    %v782 = vadd.f32 %v781, %v714
    %v783 = vadd.f32 %v782, %v715
    %v784 = vadd.f32 %v783, %v716
    %v785 = vadd.f32 %v784, %v717
    %v786 = vadd.f32 %v785, %v718
    %v787 = vadd.f32 %v786, %v719
    %v788 = vadd.f32 %v787, %v720
    %v789 = vadd.f32 %v788, %v721
    %v790 = vadd.f32 %v789, %v722
    %v791 = vadd.f32 %v790, %v723
    %v792 = vadd.f32 %v791, %v724
    %v793 = vadd.f32 %v792, %v725
    %v794 = vadd.f32 %v793, %v726
    %v795 = vrot.slane %v794, 4
    %v796 = vadd.f32 %v794, %v795
    %v797 = vrot.slane %v796, 2
    %v798 = vadd.f32 %v796, %v797
    %v799 = vrot.slane %v798, 1
    %v800 = vadd.f32 %v798, %v799
    %v801 = vld [vmem:[%s3] sm:$0xff]
    %v802 = vld [vmem:[%s3 + $0x8] sm:$0xff]
    %v803 = vld [vmem:[%s3 + $0x10] sm:$0xff]
    %v804 = vld [vmem:[%s3 + $0x18] sm:$0xff]
    %v805 = vld [vmem:[%s3 + $0x20] sm:$0xff]
    %v806 = vld [vmem:[%s3 + $0x28] sm:$0xff]
    %v807 = vld [vmem:[%s3 + $0x30] sm:$0xff]
    %v808 = vld [vmem:[%s3 + $0x38] sm:$0xff]
    %v809 = vld [vmem:[%s3 + $0x40] sm:$0xff]
    %v810 = vld [vmem:[%s3 + $0x48] sm:$0xff]
    %v811 = vld [vmem:[%s3 + $0x50] sm:$0xff]
    %v812 = vld [vmem:[%s3 + $0x58] sm:$0xff]
    %v813 = vld [vmem:[%s3 + $0x60] sm:$0xff]
    %v814 = vld [vmem:[%s3 + $0x68] sm:$0xff]
    %v815 = vld [vmem:[%s3 + $0x70] sm:$0xff]
    %v816 = vld [vmem:[%s3 + $0x78] sm:$0xff]
    %v817 = vld [vmem:[%s4] sm:$0x1]
    %v819 = vlaneseq
    %v820 = vshrl.u32 %v819, 7
    %v821 = vsub.s32 0, %v820
    %v822 = vrot.slane %v817, %v821
    %vm826 = vcmask 1041409
    %v827 = vsel %vm826, %v800, %v763
    %829 = vmatprep.subr.mxu0 0.0
    %830 = vmatpush1.msra.mxu0 %v801
    %831 = vmatprep.subr.mxu0 0.0
    %832 = vmatpush1.msra.mxu0 %v802
    %833 = vmatprep.subr.mxu0 0.0
    %834 = vmatpush1.msra.mxu0 %v803
    %835 = vmatprep.subr.mxu0 0.0
    %836 = vmatpush1.msra.mxu0 %v804
    %837 = vmatprep.subr.mxu0 0.0
    %838 = vmatpush1.msra.mxu0 %v805
    %839 = vmatprep.subr.mxu0 0.0
    %840 = vmatpush1.msra.mxu0 %v806
    %841 = vmatprep.subr.mxu0 0.0
    %842 = vmatpush1.msra.mxu0 %v807
    %843 = vmatprep.subr.mxu0 0.0
    %844 = vmatpush1.msra.mxu0 %v808
    %845 = vmatprep.subr.mxu0 0.0
    %846 = vmatpush1.msra.mxu0 %v809
    %847 = vmatprep.subr.mxu0 0.0
    %848 = vmatpush1.msra.mxu0 %v810
    %849 = vmatprep.subr.mxu0 0.0
    %850 = vmatpush1.msra.mxu0 %v811
    %851 = vmatprep.subr.mxu0 0.0
    %852 = vmatpush1.msra.mxu0 %v812
    %853 = vmatprep.subr.mxu0 0.0
    %854 = vmatpush1.msra.mxu0 %v813
    %855 = vmatprep.subr.mxu0 0.0
    %856 = vmatpush1.msra.mxu0 %v814
    %857 = vmatprep.subr.mxu0 0.0
    %858 = vmatpush1.msra.mxu0 %v815
    %859 = vmatprep.subr.mxu0 0.0
    %860 = vmatpush1.msra.mxu0 %v816
    %861 = vmatprep.subr.mxu0 0.0
    %862 = vmatpush1.msra.mxu0 0.0
    %863 = vmatprep.subr.mxu0 0.0
    %864 = vmatpush1.msra.mxu0 0.0
    %865 = vmatprep.subr.mxu0 0.0
    %866 = vmatpush1.msra.mxu0 0.0
    %867 = vmatprep.subr.mxu0 0.0
    %868 = vmatpush1.msra.mxu0 0.0
    %869 = vmatprep.subr.mxu0 0.0
    %870 = vmatpush1.msra.mxu0 0.0
    %871 = vmatprep.subr.mxu0 0.0
    %872 = vmatpush1.msra.mxu0 0.0
    %873 = vmatprep.subr.mxu0 0.0
    %874 = vmatpush1.msra.mxu0 0.0
    %875 = vmatprep.subr.mxu0 0.0
    %876 = vmatpush1.msra.mxu0 0.0
    %877 = vmatprep.subr.mxu0 0.0
    %878 = vmatpush1.msra.mxu0 0.0
    %879 = vmatprep.subr.mxu0 0.0
    %880 = vmatpush1.msra.mxu0 0.0
    %881 = vmatprep.subr.mxu0 0.0
    %882 = vmatpush1.msra.mxu0 0.0
    %883 = vmatprep.subr.mxu0 0.0
    %884 = vmatpush1.msra.mxu0 0.0
    %885 = vmatprep.subr.mxu0 0.0
    %886 = vmatpush1.msra.mxu0 0.0
    %887 = vmatprep.subr.mxu0 0.0
    %888 = vmatpush1.msra.mxu0 0.0
    %889 = vmatprep.subr.mxu0 0.0
    %890 = vmatpush1.msra.mxu0 0.0
    %891 = vmatprep.subr.mxu0 0.0
    %892 = vmatpush1.msra.mxu0 0.0
    %893 = vmatprep.mubr.f32.mxu0 0.0
    %894 = vmatmul.mubr.f32.gmra.mrb[0].mxu0 %v827
    %v895 = vpop.f32.mrb[0].mxu0
    %v896 = vadd.f32 %v822, %v895
    %v897 = vpop.f32.mrb[0].mxu0
    %898 = vdwg.mxu0
    %899 = vst [vmem:[#allocation2] sm:$0x3] %v896
    // Predicated region
    $region22: #{data_parallel_forward.1} parent=1 // pred_check
      _
    $region23: #{data_parallel_forward.1} parent=1 // pred_check_branch
      %901 = sbr.rel (0) target = $region25
    $region24: #{data_parallel_forward.1} parent=1 // pred_region
      %s903 = ssub.s32 32, 32
      %904 = vsyncadd [#allocation3], %s903
      %s906 = sshll.u32 [#allocation2], 4
      %s907 = int_to_ptr.vmem [resolvable:$true] %s906
      %909 = dma.vmem_to_hbm [thread:$0]  %s907, 32, %s5, [#allocation3]
    $region25: #{data_parallel_forward.1} parent=1 // pred_fallthru
      _
    // Predicated region
    $region26: #{data_parallel_forward.1} parent=1 // pred_check
      _
    $region27: #{data_parallel_forward.1} parent=1 // pred_check_branch
      %911 = sbr.rel (0) target = $region29
    $region28: #{data_parallel_forward.1} parent=1 // pred_region
      %912 = dma.done [#allocation3], 32
    $region29: #{data_parallel_forward.1} parent=1 // pred_fallthru
      _
    %913 = vsyncpa [#allocation3], 1

</llo_original>
